<compile_context>
chip_gen: v7x
topology: tpu7x:2x2x1
jax: 0.10.0
libtpu: 0.0.40
codegen_flags: <defaults>
</compile_context>

<pallas_src>
import jax
import jax.numpy as jnp
from jax.experimental import pallas as pl
from jax.experimental.pallas import tpu as pltpu


def attention_kernel(enc_ref, encp_ref, decp_ref, out_ref, acc_ref):
    # enc_ref  : (B, Tc, D)          encoder chunk, fp32
    # encp_ref : (B, Tc, D)          enc @ We^T + bias chunk (hoisted), fp32
    # decp_ref : (tile_t, B, 1, D)   dec @ Wd^T rows for this decoder tile (hoisted), fp32
    # out_ref  : (tile_t, B, D)      context rows for this decoder tile
    # acc_ref  : (tile_t, B, D)      fp32 context accumulator across Tenc chunks
    k = pl.program_id(1)

    @pl.when(k == 0)
    def _init():
        acc_ref[...] = jnp.zeros_like(acc_ref)

    enc = enc_ref[...]          # (B, Tc, D)
    encp = encp_ref[...]        # (B, Tc, D)  bias already folded in
    decp = decp_ref[...]        # (tile_t, B, 1, D)

    # logits[t, b, j, :] = fc(concat(dec[t, b, :], enc[b, j, :]))
    #                    = decp[t, b, :] + encp[b, j, :]
    # Pure broadcast (leading-dim replication of encp, sublane broadcast of decp);
    # no tiled/materialized copies.
    logits = decp + encp                                               # (tile_t, B, Tc, D)

    # log_softmax over the feature dim (== dim=1 of the PyTorch (B*Tenc, 2H) view).
    m = jnp.max(logits, axis=-1, keepdims=True)
    lse = jnp.log(jnp.sum(jnp.exp(logits - m), axis=-1, keepdims=True)) + m
    alpha = logits - lse                                               # (tile_t, B, Tc, D)

    # ctx[t, b, :] += sum_j alpha[t, b, j, :] * enc[b, j, :]   (fp32 accumulation)
    acc_ref[...] += jnp.sum(alpha * enc, axis=2)                       # (tile_t, B, D)

    @pl.when(k == pl.num_programs(1) - 1)
    def _finalize():
        out_ref[...] = acc_ref[...].astype(out_ref.dtype)


def attention_forward(enc, dec, W, bias, *, tile_t=None, tenc_chunk=None,
                      matmul_dtype=None):
    """enc: (B, Tenc, D), dec: (B, Tdec, D), W: (D, 2D), bias: (D,) with D = 2*hidden.

    matmul_dtype: optional dtype (e.g. jnp.bfloat16 on v6e/v7x) for the HOISTED wrapper
    einsums only; all kernel math (softmax, weighted-sum accumulation) stays fp32.
    """
    B, Tenc, D = enc.shape
    Tdec = dec.shape[1]
    assert dec.shape == (B, Tdec, D)
    assert W.shape == (D, 2 * D) and bias.shape == (D,)

    out_dtype = enc.dtype
    cdt = jnp.float32 if matmul_dtype is None else matmul_dtype

    # fc(cat(d, e)) = d @ Wd^T + e @ We^T + bias ; split W once in the wrapper.
    wd = W[:, :D].T                                                    # (D, D)
    we = W[:, D:].T                                                    # (D, D)

    # Hoisted projections (the only matmuls): computed once, fp32 results.
    encp = (jnp.einsum('bjd,df->bjf', enc.astype(cdt), we.astype(cdt),
                       preferred_element_type=jnp.float32)
            + bias.astype(jnp.float32))                                # (B, Tenc, D) fp32
    dec_t = jnp.transpose(dec, (1, 0, 2))                              # (Tdec, B, D)
    decp = jnp.einsum('tbd,df->tbf', dec_t.astype(cdt), wd.astype(cdt),
                      preferred_element_type=jnp.float32)              # (Tdec, B, D) fp32

    # ---- Tenc chunking (bounds the fp32 temporaries for long sequences) ----
    if tenc_chunk is None:
        tenc_chunk = min(Tenc, 128)
    tenc_chunk = int(min(max(1, tenc_chunk), Tenc))
    if tenc_chunk < Tenc:
        tenc_chunk = max(8, (tenc_chunk // 8) * 8)     # sublane-aligned chunks
    tenc_pad = pl.cdiv(Tenc, tenc_chunk) * tenc_chunk
    n_k = tenc_pad // tenc_chunk

    # ---- Decoder tiling: size for DMA amortization / vreg budget, NOT MXU rows. ----
    if tile_t is None:
        # ~32K fp32 elements per (tile_t, B, Tc, D) temporary.
        rows_target = max(8, 32768 // max(1, tenc_chunk * D))
        tile_t = max(1, rows_target // B)
        # >=2 decoder tiles so the "parallel" axis shards across v7x's 2 TensorCores.
        tile_t = min(tile_t, max(1, pl.cdiv(Tdec, 2)))
    tile_t = int(max(1, min(tile_t, Tdec)))
    tdec_pad = pl.cdiv(Tdec, tile_t) * tile_t
    n_tiles = tdec_pad // tile_t

    # ---- Padding (all wrapper-side; kernel never sees ragged edges). ----
    enc_p = enc.astype(jnp.float32)                     # kernel operands are fp32
    encp_p = encp
    if tenc_pad != Tenc:
        # Zero-padded encoder rows contribute exactly 0 to the context (alpha * 0).
        enc_p = jnp.pad(enc_p, ((0, 0), (0, tenc_pad - Tenc), (0, 0)))
        encp_p = jnp.pad(encp_p, ((0, 0), (0, tenc_pad - Tenc), (0, 0)))
    if tdec_pad != Tdec:
        decp = jnp.pad(decp, ((0, tdec_pad - Tdec), (0, 0), (0, 0)))
    decp4 = decp.reshape(tdec_pad, B, 1, D)             # broadcast-ready, no kernel reshape

    # ---- Advisory cost estimate (exp per element, log per (t,b,j) row). ----
    elems = tdec_pad * B * tenc_pad * D
    flops = int(6 * elems)
    transcendentals = int(tdec_pad * B * tenc_pad * (D + 1))
    bytes_accessed = int(n_tiles * 2 * B * tenc_pad * D * 4        # enc+encp streamed per tile
                         + 2 * tdec_pad * B * D * 4)               # decp in + ctx out

    # ---- Explicit VMEM budget (double-buffered blocks + fp32 temporaries + slack). ----
    blk_in = 2 * 2 * B * tenc_chunk * D * 4            # enc + encp, double-buffered
    blk_dec = 2 * tile_t * B * D * 4                   # decp, double-buffered
    blk_out = 3 * tile_t * B * D * 4                   # out (x2) + acc scratch
    tmp = 8 * tile_t * B * tenc_chunk * D * 4          # elementwise temporaries headroom
    vmem_limit = int(min(max(blk_in + blk_dec + blk_out + tmp + (2 << 20), 8 << 20),
                         64 << 20))

    out3 = pl.pallas_call(
        attention_kernel,
        out_shape=jax.ShapeDtypeStruct((tdec_pad, B, D), jnp.float32),
        grid_spec=pltpu.PrefetchScalarGridSpec(
            num_scalar_prefetch=0,
            grid=(n_tiles, n_k),
            in_specs=[
                pl.BlockSpec((B, tenc_chunk, D), lambda i, k: (0, k, 0)),    # enc chunk
                pl.BlockSpec((B, tenc_chunk, D), lambda i, k: (0, k, 0)),    # encp chunk
                pl.BlockSpec((tile_t, B, 1, D), lambda i, k: (i, 0, 0, 0)),  # decp tile
            ],
            out_specs=pl.BlockSpec((tile_t, B, D), lambda i, k: (i, 0, 0)),
            scratch_shapes=[pltpu.VMEM((tile_t, B, D), jnp.float32)],
        ),
        compiler_params=pltpu.CompilerParams(
            dimension_semantics=("parallel", "arbitrary"),
            vmem_limit_bytes=vmem_limit),
        cost_estimate=pl.CostEstimate(flops=flops,
                                      transcendentals=transcendentals,
                                      bytes_accessed=bytes_accessed),
    )(enc_p, encp_p, decp4)

    out = out3[:Tdec].transpose(1, 0, 2)                               # (B, Tdec, D)
    return out.astype(out_dtype)


def attention_ref(enc, dec, W, bias):
    """Pure-JAX reference mirroring the PyTorch loop exactly."""
    B, Tenc, D = enc.shape
    Tdec = dec.shape[1]
    ctx = []
    for i in range(Tdec):
        d = jnp.broadcast_to(dec[:, i:i + 1, :], (B, Tenc, D))
        x = jnp.concatenate([d, enc], axis=2)                          # (B, Tenc, 2D)
        logits = x.reshape(-1, 2 * D) @ W.T + bias
        alpha = jax.nn.log_softmax(logits, axis=1).reshape(B, Tenc, D)
        ctx.append(jnp.sum(alpha * enc, axis=1, keepdims=True))
    return jnp.concatenate(ctx, axis=1)


if __name__ == "__main__":
    hidden = 16
    D = 2 * hidden          # 32
    B, Tenc, Tdec = 2, 8, 8

    key = jax.random.PRNGKey(0)
    k_enc, k_dec, k_w, k_b = jax.random.split(key, 4)

    enc = jax.random.normal(k_enc, (B, Tenc, D), dtype=jnp.float32)
    dec = jax.random.normal(k_dec, (B, Tdec, D), dtype=jnp.float32)
    # nn.Linear(4H, 2H): weight (2H, 4H), bias (2H,) — deterministic synthetic init.
    W = jax.random.normal(k_w, (D, 2 * D), dtype=jnp.float32) * 0.1
    bias = jax.random.normal(k_b, (D,), dtype=jnp.float32) * 0.1

    ref = attention_ref(enc, dec, W, bias)

    # fp32 path (default): must match the reference tightly.
    out = jax.block_until_ready(attention_forward(enc, dec, W, bias))
    assert out.shape == (B, Tdec, D), out.shape
    assert jnp.allclose(out, ref, rtol=1e-5, atol=1e-5), \
        float(jnp.max(jnp.abs(out - ref)))

    # bf16 path: bf16 only in the hoisted wrapper matmuls; kernel math stays fp32.
    out_bf16 = jax.block_until_ready(
        attention_forward(enc, dec, W, bias, matmul_dtype=jnp.bfloat16))
    assert jnp.allclose(out_bf16, ref, rtol=1e-1, atol=1e-1), \
        float(jnp.max(jnp.abs(out_bf16 - ref)))

    # Exercise Tenc chunking (accumulator path), Tenc zero-padding and Tdec tiling.
    Tenc2, Tdec2 = 20, 10
    k_e2, k_d2 = jax.random.split(jax.random.PRNGKey(1), 2)
    enc2 = jax.random.normal(k_e2, (B, Tenc2, D), dtype=jnp.float32)
    dec2 = jax.random.normal(k_d2, (B, Tdec2, D), dtype=jnp.float32)
    ref2 = attention_ref(enc2, dec2, W, bias)
    out2 = jax.block_until_ready(
        attention_forward(enc2, dec2, W, bias, tenc_chunk=8))
    assert out2.shape == (B, Tdec2, D), out2.shape
    assert jnp.allclose(out2, ref2, rtol=1e-5, atol=1e-5), \
        float(jnp.max(jnp.abs(out2 - ref2)))

    print("KERNEL_OK")
</pallas_src>

<mosaic_0001>
module attributes {stable_mosaic.version = 11 : i64} {
  func.func @attention_kernel(%arg0: i32, %arg1: i32, %arg2: memref<2x8x32xf32, #tpu.memory_space<vmem>>, %arg3: memref<2x8x32xf32, #tpu.memory_space<vmem>>, %arg4: memref<4x2x1x32xf32, #tpu.memory_space<vmem>>, %arg5: memref<4x2x32xf32, #tpu.memory_space<vmem>>, %arg6: memref<4x2x32xf32, #tpu.memory_space<vmem>>) attributes {dimension_semantics = [#tpu.dimension_semantics<parallel>, #tpu.dimension_semantics<arbitrary>], iteration_bounds = array<i64: 2, 1>, scalar_prefetch = 0 : i64, scratch_operands = 1 : i64, tpu.core_type = #tpu.core_type<tc>, window_params = [{transform_indices = @transform_0, window_bounds = array<i64: 2, 8, 32>}, {transform_indices = @transform_1, window_bounds = array<i64: 2, 8, 32>}, {transform_indices = @transform_2, window_bounds = array<i64: 4, 2, 1, 32>}, {transform_indices = @transform_3, window_bounds = array<i64: 4, 2, 32>}]} {
    %c0_i32 = arith.constant 0 : i32
    %0 = arith.cmpi eq, %arg1, %c0_i32 : i32
    %1 = arith.extui %0 : i1 to i32
    %c0_i32_0 = arith.constant 0 : i32
    %2 = arith.cmpi ne, %1, %c0_i32_0 : i32
    scf.if %2 {
      %cst_20 = arith.constant 0.000000e+00 : f32
      %31 = vector.broadcast %cst_20 : f32 to vector<4x2x32xf32>
      %c0_21 = arith.constant 0 : index
      %c0_22 = arith.constant 0 : index
      %c0_23 = arith.constant 0 : index
      %32 = vector.load %arg6[%c0_21, %c0_22, %c0_23] : memref<4x2x32xf32, #tpu.memory_space<vmem>>, vector<4x2x32xf32>
      tpu.vector_store %arg6[%c0_21, %c0_22, %c0_23], %31 {strides = array<i32>} : memref<4x2x32xf32, #tpu.memory_space<vmem>>, vector<4x2x32xf32>,
    } else {
    }
    %c0 = arith.constant 0 : index
    %c0_1 = arith.constant 0 : index
    %c0_2 = arith.constant 0 : index
    %3 = vector.load %arg2[%c0, %c0_1, %c0_2] : memref<2x8x32xf32, #tpu.memory_space<vmem>>, vector<2x8x32xf32>
    %c0_3 = arith.constant 0 : index
    %c0_4 = arith.constant 0 : index
    %c0_5 = arith.constant 0 : index
    %4 = vector.load %arg3[%c0_3, %c0_4, %c0_5] : memref<2x8x32xf32, #tpu.memory_space<vmem>>, vector<2x8x32xf32>
    %c0_6 = arith.constant 0 : index
    %c0_7 = arith.constant 0 : index
    %c0_8 = arith.constant 0 : index
    %c0_9 = arith.constant 0 : index
    %5 = vector.load %arg4[%c0_6, %c0_7, %c0_8, %c0_9] : memref<4x2x1x32xf32, #tpu.memory_space<vmem>>, vector<4x2x1x32xf32>
    %6 = vector.shape_cast %4 : vector<2x8x32xf32> to vector<1x2x8x32xf32>
    %7 = vector.broadcast %5 : vector<4x2x1x32xf32> to vector<4x2x8x32xf32>
    %8 = vector.broadcast %6 : vector<1x2x8x32xf32> to vector<4x2x8x32xf32>
    %9 = arith.addf %7, %8 : vector<4x2x8x32xf32>
    %cst = arith.constant dense<0xFF800000> : vector<4x2x8xf32>
    %10 = vector.multi_reduction <maximumf>, %9, %cst [3] : vector<4x2x8x32xf32> to vector<4x2x8xf32>
    %11 = vector.shape_cast %10 : vector<4x2x8xf32> to vector<4x2x8x1xf32>
    %12 = vector.broadcast %11 : vector<4x2x8x1xf32> to vector<4x2x8x32xf32>
    %13 = arith.subf %9, %12 : vector<4x2x8x32xf32>
    %14 = math.exp %13 : vector<4x2x8x32xf32>
    %cst_10 = arith.constant dense<0.000000e+00> : vector<4x2x8xf32>
    %15 = vector.multi_reduction <add>, %14, %cst_10 [3] : vector<4x2x8x32xf32> to vector<4x2x8xf32>
    %16 = vector.shape_cast %15 : vector<4x2x8xf32> to vector<4x2x8x1xf32>
    %17 = math.log %16 : vector<4x2x8x1xf32>
    %18 = arith.addf %17, %11 : vector<4x2x8x1xf32>
    %19 = vector.broadcast %18 : vector<4x2x8x1xf32> to vector<4x2x8x32xf32>
    %20 = arith.subf %9, %19 : vector<4x2x8x32xf32>
    %c0_11 = arith.constant 0 : index
    %c0_12 = arith.constant 0 : index
    %c0_13 = arith.constant 0 : index
    %21 = vector.load %arg6[%c0_11, %c0_12, %c0_13] : memref<4x2x32xf32, #tpu.memory_space<vmem>>, vector<4x2x32xf32>
    %22 = vector.shape_cast %3 : vector<2x8x32xf32> to vector<1x2x8x32xf32>
    %23 = vector.broadcast %22 : vector<1x2x8x32xf32> to vector<4x2x8x32xf32>
    %24 = arith.mulf %20, %23 : vector<4x2x8x32xf32>
    %cst_14 = arith.constant dense<0.000000e+00> : vector<4x2x32xf32>
    %25 = vector.multi_reduction <add>, %24, %cst_14 [2] : vector<4x2x8x32xf32> to vector<4x2x32xf32>
    %26 = arith.addf %21, %25 : vector<4x2x32xf32>
    %c0_15 = arith.constant 0 : index
    %c0_16 = arith.constant 0 : index
    %c0_17 = arith.constant 0 : index
    %27 = vector.load %arg6[%c0_15, %c0_16, %c0_17] : memref<4x2x32xf32, #tpu.memory_space<vmem>>, vector<4x2x32xf32>
    tpu.vector_store %arg6[%c0_15, %c0_16, %c0_17], %26 {strides = array<i32>} : memref<4x2x32xf32, #tpu.memory_space<vmem>>, vector<4x2x32xf32>,
    %c0_i32_18 = arith.constant 0 : i32
    %28 = arith.cmpi eq, %arg1, %c0_i32_18 : i32
    %29 = arith.extui %28 : i1 to i32
    %c0_i32_19 = arith.constant 0 : i32
    %30 = arith.cmpi ne, %29, %c0_i32_19 : i32
    scf.if %30 {
      %c0_20 = arith.constant 0 : index
      %c0_21 = arith.constant 0 : index
      %c0_22 = arith.constant 0 : index
      %31 = vector.load %arg6[%c0_20, %c0_21, %c0_22] : memref<4x2x32xf32, #tpu.memory_space<vmem>>, vector<4x2x32xf32>
      %c0_23 = arith.constant 0 : index
      %c0_24 = arith.constant 0 : index
      %c0_25 = arith.constant 0 : index
      %32 = vector.load %arg5[%c0_23, %c0_24, %c0_25] : memref<4x2x32xf32, #tpu.memory_space<vmem>>, vector<4x2x32xf32>
      tpu.vector_store %arg5[%c0_23, %c0_24, %c0_25], %31 {strides = array<i32>} : memref<4x2x32xf32, #tpu.memory_space<vmem>>, vector<4x2x32xf32>,
    } else {
    }
    return
  }
  func.func @transform_0(%arg0: i32, %arg1: i32) -> (i32, i32, i32) {
    %c0_i32 = arith.constant 0 : i32
    %c0_i32_0 = arith.constant 0 : i32
    %c0_i32_1 = arith.constant 0 : i32
    return %c0_i32, %arg1, %c0_i32_0 : i32, i32, i32
  }
  func.func @transform_1(%arg0: i32, %arg1: i32) -> (i32, i32, i32) {
    %c0_i32 = arith.constant 0 : i32
    %c0_i32_0 = arith.constant 0 : i32
    %c0_i32_1 = arith.constant 0 : i32
    return %c0_i32, %arg1, %c0_i32_0 : i32, i32, i32
  }
  func.func @transform_2(%arg0: i32, %arg1: i32) -> (i32, i32, i32, i32) {
    %c0_i32 = arith.constant 0 : i32
    %c0_i32_0 = arith.constant 0 : i32
    %c0_i32_1 = arith.constant 0 : i32
    %c0_i32_2 = arith.constant 0 : i32
    return %arg0, %c0_i32, %c0_i32_0, %c0_i32_1 : i32, i32, i32, i32
  }
  func.func @transform_3(%arg0: i32, %arg1: i32) -> (i32, i32, i32) {
    %c0_i32 = arith.constant 0 : i32
    %c0_i32_0 = arith.constant 0 : i32
    %c0_i32_1 = arith.constant 0 : i32
    return %arg0, %c0_i32, %c0_i32_0 : i32, i32, i32
  }
}

</mosaic_0001>

<llo_original>
// kernel: tpu_custom_call.1
$region0: #{tpu_custom_call.1}
  #allocation0 [shape = 'u32[]', space=smem, size = 0x4, offset = 0x4, fixed_abs, tag = 'smem constant byte address 0x4 - core index']
  #allocation1 [shape = 'u32[144,128]{1,0:T(1,128)}', space=vmem, size = 0x12000, scoped, tag = 'internal scratch']
  #allocation2 [shape = 'f32[4,2,32]{2,1,0:T(2,128)}', space=vmem, size = 0x1000, scoped, tag = 'scratch operand']
  %s0 = inlined_call_operand.hbm [shape: f32[2,8,32], index: 0, kind: input, shape index: {}]
  %s1 = inlined_call_operand.hbm [shape: f32[2,8,32], index: 1, kind: input, shape index: {}]
  %s2 = inlined_call_operand.hbm [shape: f32[8,2,1,32], index: 2, kind: input, shape index: {}]
  %s3 = inlined_call_operand.hbm [shape: f32[8,2,32], index: 3, kind: output, shape index: {}]
  %s4 = sld [smem:[#allocation0]]
  $region65: #{tpu_custom_call.1} parent=0
    _
  %s6 = ssub.s32 1, %s4
  %s7 = scalar_select 0, %s6, %s4
  $region1: #{tpu_custom_call.1} parent=0
    #allocation3 [shape = 'u8[8192]{0}', space=vmem, size = 0x2000, scoped, tag = 'input window, operand 0, single buffered']
    #allocation4 [shape = 's32[2]{0}', space=sflag, size = 0x8, scoped, tag = 'scoped memory for tpu_custom_call.1']
    #allocation5 [shape = 's32[2]{0}', space=sflag, size = 0x8, scoped, tag = 'scoped memory for tpu_custom_call.1']
    #allocation6 [shape = 'u8[8192]{0}', space=vmem, size = 0x2000, scoped, tag = 'input window, operand 1, single buffered']
    #allocation7 [shape = 's32[1]{0}', space=sflag, size = 0x4, scoped, tag = 'scoped memory for tpu_custom_call.1']
    #allocation8 [shape = 'u8[8192]{0}', space=vmem, size = 0x2000, scoped, tag = 'input window, operand 2']
    #allocation9 [shape = 'u8[8192]{0}', space=vmem, size = 0x2000, scoped, tag = 'output window, operand 0']
    %8 = vsyncpa [#allocation4], 0
    %9 = vsyncpa [#allocation7], 0
    %10 = vsyncpa [#allocation5], 0
    %s11 = scalar_lea.sflag [#allocation5], 1
    %12 = vsyncpa %s11, 0
    loop: start=0, step=1, limit=4
    $region2: #{tpu_custom_call.1} parent=1 // loop_pre_header
      _
    $region3: #{tpu_custom_call.1} parent=1 // loop_header
      %s14 = sphi 0, %s18
      %p15 = scmp.ge.s32.totalorder %s14, 4
      %s21 = sphi 0, %s33
      %s22 = sphi 0, %s29
      %s23 = sphi 0, %s21
      %s24 = sphi 0, %s22
      %s25 = sphi 0, %s23
      %s26 = sphi 0, %s24
      %s36 = sphi 0, %s38
      %s39 = sphi 0, %s36
      %s40 = sphi 0, %s39
      %s56 = sphi 0, %s40
      %s62 = sphi 0, %s64
      %s65 = sphi 0, %s62
      %s66 = sphi 0, %s65
      %s82 = sphi 0, %s66
      %s88 = sphi 0, %s90
      %s91 = sphi 0, %s88
      %s92 = sphi 0, %s91
      %s108 = sphi 0, %s92
      %s114 = sphi 0, %s116
      %s117 = sphi 0, %s114
      %s118 = sphi 0, %s117
      %s134 = sphi 0, %s118
    $region4: #{tpu_custom_call.1} parent=1 // loop_header_branch
      %17 = sbr.rel (%p15) target = $region8
    $region5: #{tpu_custom_call.1} parent=1 // loop_body
      %s19 = ssub.s32 %s14, 1
      %s20 = ssub.s32 %s14, 2
      %s27 = sadd.s32 1, %s22
      %p28 = scmp.ge.s32.totalorder %s27, 1
      %s29 = scalar_select %p28, 0, %s27
      %s30 = sadd.s32 1, %s21
      %s31 = scalar_select %p28, %s30, %s21
      %p32 = scmp.ge.s32.totalorder %s31, 2
      %s33 = scalar_select %p32, 0, %s31
      %s34 = ssub.s32 %s22, %s29
      %p35 = scmp.eq.s32.totalorder %s34, 0
      %s37 = sadd.s32 %s36, 1
      %s38 = scalar_select %p35, %s36, %s37
      %p41 = pneg %p35
      %p42 = scmp.eq.s32.totalorder %s14, 1
      %p43 = por %p41, %p42
      %p44 = scmp.ne.s32.totalorder %s36, %s39
      %p45 = scmp.eq.s32.totalorder %s14, 0
      %p46 = por %p44, %p45
      %p47 = scmp.ne.s32.totalorder %s36, %s39
      %p48 = scmp.eq.s32.totalorder %s19, 1
      %p49 = por %p47, %p48
      %p50 = scmp.ne.s32.totalorder %s39, %s40
      %p51 = scmp.eq.s32.totalorder %s19, 0
      %p52 = por %p50, %p51
      %p53 = scmp.ne.s32.totalorder %s39, %s40
      %p54 = scmp.eq.s32.totalorder %s20, 1
      %p55 = por %p53, %p54
      %p57 = scmp.ne.s32.totalorder %s40, %s56
      %p58 = scmp.eq.s32.totalorder %s20, 0
      %p59 = por %p57, %p58
      %s60 = ssub.s32 %s22, %s29
      %p61 = scmp.eq.s32.totalorder %s60, 0
      %s63 = sadd.s32 %s62, 1
      %s64 = scalar_select %p61, %s62, %s63
      %p67 = pneg %p61
      %p68 = scmp.eq.s32.totalorder %s14, 1
      %p69 = por %p67, %p68
      %p70 = scmp.ne.s32.totalorder %s62, %s65
      %p71 = scmp.eq.s32.totalorder %s14, 0
      %p72 = por %p70, %p71
      %p73 = scmp.ne.s32.totalorder %s62, %s65
      %p74 = scmp.eq.s32.totalorder %s19, 1
      %p75 = por %p73, %p74
      %p76 = scmp.ne.s32.totalorder %s65, %s66
      %p77 = scmp.eq.s32.totalorder %s19, 0
      %p78 = por %p76, %p77
      %p79 = scmp.ne.s32.totalorder %s65, %s66
      %p80 = scmp.eq.s32.totalorder %s20, 1
      %p81 = por %p79, %p80
      %p83 = scmp.ne.s32.totalorder %s66, %s82
      %p84 = scmp.eq.s32.totalorder %s20, 0
      %p85 = por %p83, %p84
      %s86 = ssub.s32 %s21, %s33
      %p87 = scmp.eq.s32.totalorder %s86, 0
      %s89 = sadd.s32 %s88, 1
      %s90 = scalar_select %p87, %s88, %s89
      %p93 = pneg %p87
      %p94 = scmp.eq.s32.totalorder %s14, 1
      %p95 = por %p93, %p94
      %p96 = scmp.ne.s32.totalorder %s88, %s91
      %p97 = scmp.eq.s32.totalorder %s14, 0
      %p98 = por %p96, %p97
      %p99 = scmp.ne.s32.totalorder %s88, %s91
      %p100 = scmp.eq.s32.totalorder %s19, 1
      %p101 = por %p99, %p100
      %p102 = scmp.ne.s32.totalorder %s91, %s92
      %p103 = scmp.eq.s32.totalorder %s19, 0
      %p104 = por %p102, %p103
      %p105 = scmp.ne.s32.totalorder %s91, %s92
      %p106 = scmp.eq.s32.totalorder %s20, 1
      %p107 = por %p105, %p106
      %p109 = scmp.ne.s32.totalorder %s92, %s108
      %p110 = scmp.eq.s32.totalorder %s20, 0
      %p111 = por %p109, %p110
      %s112 = ssub.s32 %s21, %s33
      %p113 = scmp.eq.s32.totalorder %s112, 0
      %s115 = sadd.s32 %s114, 1
      %s116 = scalar_select %p113, %s114, %s115
      %p119 = pneg %p113
      %p120 = scmp.eq.s32.totalorder %s14, 1
      %p121 = por %p119, %p120
      %p122 = scmp.ne.s32.totalorder %s114, %s117
      %p123 = scmp.eq.s32.totalorder %s14, 0
      %p124 = por %p122, %p123
      %p125 = scmp.ne.s32.totalorder %s114, %s117
      %p126 = scmp.eq.s32.totalorder %s19, 1
      %p127 = por %p125, %p126
      %p128 = scmp.ne.s32.totalorder %s117, %s118
      %p129 = scmp.eq.s32.totalorder %s19, 0
      %p130 = por %p128, %p129
      %p131 = scmp.ne.s32.totalorder %s117, %s118
      %p132 = scmp.eq.s32.totalorder %s20, 1
      %p133 = por %p131, %p132
      %p135 = scmp.ne.s32.totalorder %s118, %s134
      %p136 = scmp.eq.s32.totalorder %s20, 0
      %p137 = por %p135, %p136
      %p138 = scmp.le.s32.totalorder 1, %s14
      %p139 = scmp.lt.s32.totalorder %s14, 3
      %p140 = pnand %p138, %p139
      %p141 = pneg %p140
      // Predicated region
      $region9: #{tpu_custom_call.1} parent=5 // pred_check
        _
      $region10: #{tpu_custom_call.1} parent=5 // pred_check_branch
        %143 = sbr.rel (%p140) target = $region12
      $region11: #{tpu_custom_call.1} parent=5 // pred_region
        %s144 = ssub.s32 %s14, 1
        // Predicated region
        $region13: #{tpu_custom_call.1} parent=11 // pred_check
          %p145 = pneg %p52
        $region14: #{tpu_custom_call.1} parent=11 // pred_check_branch
          %147 = sbr.rel (%p145) target = $region16
        $region15: #{tpu_custom_call.1} parent=11 // pred_region
          %s149 = ssub.s32 256, 256
          %150 = vsyncadd [#allocation4], %s149
          %s151 = smul.addr %s24, 128
          %s152 = scalar_lea.hbm %s0, %s151
          %s153 = sshll.u32 [#allocation3], 4
          %s154 = int_to_ptr.vmem [resolvable:$true] %s153
          %159 = dma.hbm_to_vmem [thread:$0]  %s152, 256, %s154, [#allocation4], 128, 128, 8
        $region16: #{tpu_custom_call.1} parent=11 // pred_fallthru
          _
        // Predicated region
        $region17: #{tpu_custom_call.1} parent=11 // pred_check
          %p160 = pneg %p78
        $region18: #{tpu_custom_call.1} parent=11 // pred_check_branch
          %162 = sbr.rel (%p160) target = $region20
        $region19: #{tpu_custom_call.1} parent=11 // pred_region
          %s164 = ssub.s32 256, 256
          %165 = vsyncadd [#allocation7], %s164
          %s166 = smul.addr %s24, 128
          %s167 = scalar_lea.hbm %s1, %s166
          %s168 = sshll.u32 [#allocation6], 4
          %s169 = int_to_ptr.vmem [resolvable:$true] %s168
          %174 = dma.hbm_to_vmem [thread:$0]  %s167, 256, %s169, [#allocation7], 128, 128, 8
        $region20: #{tpu_custom_call.1} parent=11 // pred_fallthru
          _
      $region12: #{tpu_custom_call.1} parent=5 // pred_fallthru
        _
      %p175 = scmp.lt.s32.totalorder %s14, 2
      // Predicated region
      $region21: #{tpu_custom_call.1} parent=5 // pred_check
        %p176 = pneg %p175
      $region22: #{tpu_custom_call.1} parent=5 // pred_check_branch
        %178 = sbr.rel (%p176) target = $region24
      $region23: #{tpu_custom_call.1} parent=5 // pred_region
        // Predicated region
        $region25: #{tpu_custom_call.1} parent=23 // pred_check
          %p179 = pneg %p98
        $region26: #{tpu_custom_call.1} parent=23 // pred_check_branch
          %181 = sbr.rel (%p179) target = $region28
        $region27: #{tpu_custom_call.1} parent=23 // pred_region
          %s182 = sand.u32 %s14, 1
          %s183 = scalar_lea.sflag [#allocation4], %s182
          %s184 = sand.u32 %s88, 1
          %s185 = smul.addr %s184, 8
          %s186 = scalar_lea.vmem [#allocation8], %s185
          %s187 = smul.u32 4, %s21
          %s189 = ssub.s32 128, 128
          %190 = vsyncadd %s183, %s189
          %s191 = smul.addr %s187, 2
          %s192 = smul.addr %s191, 16
          %s193 = scalar_lea.hbm %s2, %s192
          %s194 = sshll.u32 %s186, 4
          %s195 = int_to_ptr.vmem [resolvable:$true] %s194
          %200 = dma.hbm_to_vmem [thread:$0]  %s193, 128, %s195, %s183, 16, 16, 1
        $region28: #{tpu_custom_call.1} parent=23 // pred_fallthru
          _
      $region24: #{tpu_custom_call.1} parent=5 // pred_fallthru
        _
      %p201 = scmp.le.s32.totalorder 1, %s14
      %p202 = scmp.lt.s32.totalorder %s14, 3
      %p203 = pnand %p201, %p202
      %p204 = pneg %p203
      // Predicated region
      $region29: #{tpu_custom_call.1} parent=5 // pred_check
        _
      $region30: #{tpu_custom_call.1} parent=5 // pred_check_branch
        %206 = sbr.rel (%p203) target = $region32
      $region31: #{tpu_custom_call.1} parent=5 // pred_region
        %s207 = ssub.s32 %s14, 1
        // Predicated region
        $region33: #{tpu_custom_call.1} parent=31 // pred_check
          %p208 = pneg %p52
        $region34: #{tpu_custom_call.1} parent=31 // pred_check_branch
          %210 = sbr.rel (%p208) target = $region36
        $region35: #{tpu_custom_call.1} parent=31 // pred_region
          %211 = dma.done [#allocation4], 256
        $region36: #{tpu_custom_call.1} parent=31 // pred_fallthru
          _
        // Predicated region
        $region37: #{tpu_custom_call.1} parent=31 // pred_check
          %p212 = pneg %p78
        $region38: #{tpu_custom_call.1} parent=31 // pred_check_branch
          %214 = sbr.rel (%p212) target = $region40
        $region39: #{tpu_custom_call.1} parent=31 // pred_region
          %215 = dma.done [#allocation7], 256
        $region40: #{tpu_custom_call.1} parent=31 // pred_fallthru
          _
        %s216 = sand.u32 %s19, 1
        %s217 = scalar_lea.sflag [#allocation4], %s216
        %s218 = sand.u32 %s91, 1
        %s219 = smul.addr %s218, 8
        %s220 = scalar_lea.vmem [#allocation8], %s219
        // Predicated region
        $region41: #{tpu_custom_call.1} parent=31 // pred_check
          %p221 = pneg %p104
        $region42: #{tpu_custom_call.1} parent=31 // pred_check_branch
          %223 = sbr.rel (%p221) target = $region44
        $region43: #{tpu_custom_call.1} parent=31 // pred_region
          %224 = dma.done %s217, 128
        $region44: #{tpu_custom_call.1} parent=31 // pred_fallthru
          _
        %p225 = pneg %p52
        %p226 = pneg %p49
        %p227 = pneg %p78
        %p228 = pneg %p75
        %s229 = sand.u32 %s19, 1
        %s230 = scalar_lea.sflag [#allocation4], %s229
        %s231 = sand.u32 %s91, 1
        %s232 = smul.addr %s231, 8
        %s233 = scalar_lea.vmem [#allocation8], %s232
        %p234 = pneg %p104
        %p235 = pneg %p101
        %p236 = pneg %p130
        %p237 = pneg %p127
        %s238 = sand.u32 %s117, 1
        %s239 = scalar_lea.sflag [#allocation5], %s238
        %s240 = sand.u32 %s117, 1
        %s241 = smul.addr %s240, 8
        %s242 = scalar_lea.vmem [#allocation9], %s241
        %s243 = smul.u32 4, %s23
        %s244 = smul.u32 4, %s23
        %p245 = scmp.eq.s32.totalorder %s24, 0
        // Predicated region
        $region45: #{tpu_custom_call.1} parent=31 // pred_check
          %p246 = pneg %p245
        $region46: #{tpu_custom_call.1} parent=31 // pred_check_branch
          %248 = sbr.rel (%p246) target = $region48
        $region47: #{tpu_custom_call.1} parent=31 // pred_region
          %vm249 = vcmask 254976
          %250 = vst.msk [vmem:[#allocation2] sm:$0x3] %vm249, 0.0
          %251 = vst.msk [vmem:[#allocation2 + $0x2] sm:$0x3] %vm249, 0.0
          %252 = vst.msk [vmem:[#allocation2 + $0x4] sm:$0x3] %vm249, 0.0
          %253 = vst.msk [vmem:[#allocation2 + $0x6] sm:$0x3] %vm249, 0.0
        $region48: #{tpu_custom_call.1} parent=31 // pred_fallthru
          _
        %v254 = vld [vmem:[#allocation3] sm:$0xff]
        %v255 = vld [vmem:[#allocation3 + $0x8] sm:$0xff]
        %v256 = vld [vmem:[#allocation6] sm:$0xff]
        %v257 = vld [vmem:[#allocation6 + $0x8] sm:$0xff]
        %v258 = vld [vmem:[%s220] sm:$0x1]
        %v259 = vld [vmem:[%s220 + $0x1] sm:$0x1]
        %v260 = vld [vmem:[%s220 + $0x2] sm:$0x1]
        %v261 = vld [vmem:[%s220 + $0x3] sm:$0x1]
        %v262 = vld [vmem:[%s220 + $0x4] sm:$0x1]
        %v263 = vld [vmem:[%s220 + $0x5] sm:$0x1]
        %v264 = vld [vmem:[%s220 + $0x6] sm:$0x1]
        %v265 = vld [vmem:[%s220 + $0x7] sm:$0x1]
        %v274 = vlaneseq
        %v275 = vshrl.u32 %v274, 7
        %v276 = vsub.s32 0, %v275
        %v277 = vrot.slane %v258, %v276
        %v278 = vlaneseq
        %v279 = vshrl.u32 %v278, 7
        %v280 = vsub.s32 0, %v279
        %v281 = vrot.slane %v259, %v280
        %v282 = vlaneseq
        %v283 = vshrl.u32 %v282, 7
        %v284 = vsub.s32 0, %v283
        %v285 = vrot.slane %v260, %v284
        %v286 = vlaneseq
        %v287 = vshrl.u32 %v286, 7
        %v288 = vsub.s32 0, %v287
        %v289 = vrot.slane %v261, %v288
        %v290 = vlaneseq
        %v291 = vshrl.u32 %v290, 7
        %v292 = vsub.s32 0, %v291
        %v293 = vrot.slane %v262, %v292
        %v294 = vlaneseq
        %v295 = vshrl.u32 %v294, 7
        %v296 = vsub.s32 0, %v295
        %v297 = vrot.slane %v263, %v296
        %v298 = vlaneseq
        %v299 = vshrl.u32 %v298, 7
        %v300 = vsub.s32 0, %v299
        %v301 = vrot.slane %v264, %v300
        %v302 = vlaneseq
        %v303 = vshrl.u32 %v302, 7
        %v304 = vsub.s32 0, %v303
        %v305 = vrot.slane %v265, %v304
        %v314 = vadd.f32 %v277, %v256
        %v315 = vadd.f32 %v281, %v257
        %v316 = vadd.f32 %v285, %v256
        %v317 = vadd.f32 %v289, %v257
        %v318 = vadd.f32 %v293, %v256
        %v319 = vadd.f32 %v297, %v257
        %v320 = vadd.f32 %v301, %v256
        %v321 = vadd.f32 %v305, %v257
        %vm322 = vcmask 261120
        %v323 = vsel %vm322, %v314, -inf
        %324 = vmax.xlane.f32.xlu0 %v323
        %v325 = vpop.xlane.xlu0 %324
        %v326 = vsel %vm322, %v315, -inf
        %327 = vmax.xlane.f32.xlu0 %v326
        %v328 = vpop.xlane.xlu0 %327
        %v329 = vsel %vm322, %v316, -inf
        %330 = vmax.xlane.f32.xlu0 %v329
        %v331 = vpop.xlane.xlu0 %330
        %v332 = vsel %vm322, %v317, -inf
        %333 = vmax.xlane.f32.xlu0 %v332
        %v334 = vpop.xlane.xlu0 %333
        %v335 = vsel %vm322, %v318, -inf
        %336 = vmax.xlane.f32.xlu0 %v335
        %v337 = vpop.xlane.xlu0 %336
        %v338 = vsel %vm322, %v319, -inf
        %339 = vmax.xlane.f32.xlu0 %v338
        %v340 = vpop.xlane.xlu0 %339
        %v341 = vsel %vm322, %v320, -inf
        %342 = vmax.xlane.f32.xlu0 %v341
        %v343 = vpop.xlane.xlu0 %342
        %v344 = vsel %vm322, %v321, -inf
        %345 = vmax.xlane.f32.xlu0 %v344
        %v346 = vpop.xlane.xlu0 %345
        %v347 = vsub.f32 %v314, %v325
        %v348 = vsub.f32 %v315, %v328
        %v349 = vsub.f32 %v316, %v331
        %v350 = vsub.f32 %v317, %v334
        %v351 = vsub.f32 %v318, %v337
        %v352 = vsub.f32 %v319, %v340
        %v353 = vsub.f32 %v320, %v343
        %v354 = vsub.f32 %v321, %v346
        %v355 = vmul.f32 %v347, 1.442695
        %v356 = vpow.pop %v355
        %v357 = vmul.f32 %v348, 1.442695
        %v358 = vpow.pop %v357
        %v359 = vmul.f32 %v349, 1.442695
        %v360 = vpow.pop %v359
        %v361 = vmul.f32 %v350, 1.442695
        %v362 = vpow.pop %v361
        %v363 = vmul.f32 %v351, 1.442695
        %v364 = vpow.pop %v363
        %v365 = vmul.f32 %v352, 1.442695
        %v366 = vpow.pop %v365
        %v367 = vmul.f32 %v353, 1.442695
        %v368 = vpow.pop %v367
        %v369 = vmul.f32 %v354, 1.442695
        %v370 = vpow.pop %v369
        %v371 = vsel %vm322, %v356, 0.0
        %372 = vadd.xlane.f32.xlu0 %v371
        %v373 = vpop.xlane.xlu0 %372
        %v374 = vsel %vm322, %v358, 0.0
        %375 = vadd.xlane.f32.xlu0 %v374
        %v376 = vpop.xlane.xlu0 %375
        %v377 = vsel %vm322, %v360, 0.0
        %378 = vadd.xlane.f32.xlu0 %v377
        %v379 = vpop.xlane.xlu0 %378
        %v380 = vsel %vm322, %v362, 0.0
        %381 = vadd.xlane.f32.xlu0 %v380
        %v382 = vpop.xlane.xlu0 %381
        %v383 = vsel %vm322, %v364, 0.0
        %384 = vadd.xlane.f32.xlu0 %v383
        %v385 = vpop.xlane.xlu0 %384
        %v386 = vsel %vm322, %v366, 0.0
        %387 = vadd.xlane.f32.xlu0 %v386
        %v388 = vpop.xlane.xlu0 %387
        %v389 = vsel %vm322, %v368, 0.0
        %390 = vadd.xlane.f32.xlu0 %v389
        %v391 = vpop.xlane.xlu0 %390
        %v392 = vsel %vm322, %v370, 0.0
        %393 = vadd.xlane.f32.xlu0 %v392
        %v394 = vpop.xlane.xlu0 %393
        %v395 = vlog2.pop %v373
        %v396 = vmul.f32 %v395, 0.6931472
        %v397 = vlog2.pop %v376
        %v398 = vmul.f32 %v397, 0.6931472
        %v399 = vlog2.pop %v379
        %v400 = vmul.f32 %v399, 0.6931472
        %v401 = vlog2.pop %v382
        %v402 = vmul.f32 %v401, 0.6931472
        %v403 = vlog2.pop %v385
        %v404 = vmul.f32 %v403, 0.6931472
        %v405 = vlog2.pop %v388
        %v406 = vmul.f32 %v405, 0.6931472
        %v407 = vlog2.pop %v391
        %v408 = vmul.f32 %v407, 0.6931472
        %v409 = vlog2.pop %v394
        %v410 = vmul.f32 %v409, 0.6931472
        %v411 = vadd.f32 %v396, %v325
        %v412 = vadd.f32 %v398, %v328
        %v413 = vadd.f32 %v400, %v331
        %v414 = vadd.f32 %v402, %v334
        %v415 = vadd.f32 %v404, %v337
        %v416 = vadd.f32 %v406, %v340
        %v417 = vadd.f32 %v408, %v343
        %v418 = vadd.f32 %v410, %v346
        %v419 = vsub.f32 %v314, %v411
        %v420 = vsub.f32 %v315, %v412
        %v421 = vsub.f32 %v316, %v413
        %v422 = vsub.f32 %v317, %v414
        %v423 = vsub.f32 %v318, %v415
        %v424 = vsub.f32 %v319, %v416
        %v425 = vsub.f32 %v320, %v417
        %v426 = vsub.f32 %v321, %v418
        %v427 = vld [vmem:[#allocation2] sm:$0x3]
        %v428 = vld [vmem:[#allocation2 + $0x2] sm:$0x3]
        %v429 = vld [vmem:[#allocation2 + $0x4] sm:$0x3]
        %v430 = vld [vmem:[#allocation2 + $0x6] sm:$0x3]
        %v431 = vmul.f32 %v419, %v254
        %v432 = vmul.f32 %v420, %v255
        %v433 = vmul.f32 %v421, %v254
        %v434 = vmul.f32 %v422, %v255
        %v435 = vmul.f32 %v423, %v254
        %v436 = vmul.f32 %v424, %v255
        %v437 = vmul.f32 %v425, %v254
        %v438 = vmul.f32 %v426, %v255
        %v439 = vsel %vm322, %v431, 0.0
        %v440 = vrot.slane %v439, 4
        %v441 = vadd.f32 %v439, %v440
        %v442 = vrot.slane %v441, 2
        %v443 = vadd.f32 %v441, %v442
        %v444 = vrot.slane %v443, 1
        %v445 = vadd.f32 %v443, %v444
        %v446 = vsel %vm322, %v432, 0.0
        %v447 = vrot.slane %v446, 4
        %v448 = vadd.f32 %v446, %v447
        %v449 = vrot.slane %v448, 2
        %v450 = vadd.f32 %v448, %v449
        %v451 = vrot.slane %v450, 1
        %v452 = vadd.f32 %v450, %v451
        %v453 = vsel %vm322, %v433, 0.0
        %v454 = vrot.slane %v453, 4
        %v455 = vadd.f32 %v453, %v454
        %v456 = vrot.slane %v455, 2
        %v457 = vadd.f32 %v455, %v456
        %v458 = vrot.slane %v457, 1
        %v459 = vadd.f32 %v457, %v458
        %v460 = vsel %vm322, %v434, 0.0
        %v461 = vrot.slane %v460, 4
        %v462 = vadd.f32 %v460, %v461
        %v463 = vrot.slane %v462, 2
        %v464 = vadd.f32 %v462, %v463
        %v465 = vrot.slane %v464, 1
        %v466 = vadd.f32 %v464, %v465
        %v467 = vsel %vm322, %v435, 0.0
        %v468 = vrot.slane %v467, 4
        %v469 = vadd.f32 %v467, %v468
        %v470 = vrot.slane %v469, 2
        %v471 = vadd.f32 %v469, %v470
        %v472 = vrot.slane %v471, 1
        %v473 = vadd.f32 %v471, %v472
        %v474 = vsel %vm322, %v436, 0.0
        %v475 = vrot.slane %v474, 4
        %v476 = vadd.f32 %v474, %v475
        %v477 = vrot.slane %v476, 2
        %v478 = vadd.f32 %v476, %v477
        %v479 = vrot.slane %v478, 1
        %v480 = vadd.f32 %v478, %v479
        %v481 = vsel %vm322, %v437, 0.0
        %v482 = vrot.slane %v481, 4
        %v483 = vadd.f32 %v481, %v482
        %v484 = vrot.slane %v483, 2
        %v485 = vadd.f32 %v483, %v484
        %v486 = vrot.slane %v485, 1
        %v487 = vadd.f32 %v485, %v486
        %v488 = vsel %vm322, %v438, 0.0
        %v489 = vrot.slane %v488, 4
        %v490 = vadd.f32 %v488, %v489
        %v491 = vrot.slane %v490, 2
        %v492 = vadd.f32 %v490, %v491
        %v493 = vrot.slane %v492, 1
        %v494 = vadd.f32 %v492, %v493
        %vm503 = vcmask 1041409
        %v504 = vsel %vm503, %v452, %v445
        %v505 = vsel %vm503, %v466, %v459
        %v506 = vsel %vm503, %v480, %v473
        %v507 = vsel %vm503, %v494, %v487
        %v512 = vadd.f32 %v427, %v504
        %v513 = vadd.f32 %v428, %v505
        %v514 = vadd.f32 %v429, %v506
        %v515 = vadd.f32 %v430, %v507
        %vm516 = vcmask 254976
        %517 = vst.msk [vmem:[#allocation2] sm:$0x3] %vm516, %v512
        %518 = vst.msk [vmem:[#allocation2 + $0x2] sm:$0x3] %vm516, %v513
        %519 = vst.msk [vmem:[#allocation2 + $0x4] sm:$0x3] %vm516, %v514
        %520 = vst.msk [vmem:[#allocation2 + $0x6] sm:$0x3] %vm516, %v515
        // Predicated region
        $region49: #{tpu_custom_call.1} parent=31 // pred_check
          %p521 = pneg %p245
        $region50: #{tpu_custom_call.1} parent=31 // pred_check_branch
          %523 = sbr.rel (%p521) target = $region52
        $region51: #{tpu_custom_call.1} parent=31 // pred_region
          %v524 = vld [vmem:[#allocation2] sm:$0x3]
          %v525 = vld [vmem:[#allocation2 + $0x2] sm:$0x3]
          %v526 = vld [vmem:[#allocation2 + $0x4] sm:$0x3]
          %v527 = vld [vmem:[#allocation2 + $0x6] sm:$0x3]
          %528 = vst.msk [vmem:[%s242] sm:$0x3] %vm516, %v524
          %529 = vst.msk [vmem:[%s242 + $0x2] sm:$0x3] %vm516, %v525
          %530 = vst.msk [vmem:[%s242 + $0x4] sm:$0x3] %vm516, %v526
          %531 = vst.msk [vmem:[%s242 + $0x6] sm:$0x3] %vm516, %v527
        $region52: #{tpu_custom_call.1} parent=31 // pred_fallthru
          _
        %s532 = sand.u32 %s117, 1
        %s533 = scalar_lea.sflag [#allocation5], %s532
        %s534 = sand.u32 %s117, 1
        %s535 = smul.addr %s534, 8
        %s536 = scalar_lea.vmem [#allocation9], %s535
        // Predicated region
        $region53: #{tpu_custom_call.1} parent=31 // pred_check
          %p537 = pneg %p127
        $region54: #{tpu_custom_call.1} parent=31 // pred_check_branch
          %539 = sbr.rel (%p537) target = $region56
        $region55: #{tpu_custom_call.1} parent=31 // pred_region
          %s540 = smul.u32 4, %s23
          %s542 = ssub.s32 128, 128
          %543 = vsyncadd %s533, %s542
          %s544 = smul.addr %s540, 32
          %s545 = scalar_lea.hbm %s3, %s544
          %s546 = sshll.u32 %s536, 4
          %s547 = int_to_ptr.vmem [resolvable:$true] %s546
          %552 = dma.vmem_to_hbm [thread:$0]  %s547, 128, %s545, %s533, 32, 32, 2
        $region56: #{tpu_custom_call.1} parent=31 // pred_fallthru
          _
      $region32: #{tpu_custom_call.1} parent=5 // pred_fallthru
        _
      %p553 = scmp.le.s32.totalorder 2, %s14
      // Predicated region
      $region57: #{tpu_custom_call.1} parent=5 // pred_check
        %p554 = pneg %p553
      $region58: #{tpu_custom_call.1} parent=5 // pred_check_branch
        %556 = sbr.rel (%p554) target = $region60
      $region59: #{tpu_custom_call.1} parent=5 // pred_region
        %s557 = ssub.s32 %s14, 2
        // Predicated region
        $region61: #{tpu_custom_call.1} parent=59 // pred_check
          %p558 = pneg %p133
        $region62: #{tpu_custom_call.1} parent=59 // pred_check_branch
          %560 = sbr.rel (%p558) target = $region64
        $region63: #{tpu_custom_call.1} parent=59 // pred_region
          %s561 = sand.u32 %s118, 1
          %s562 = scalar_lea.sflag [#allocation5], %s561
          %s563 = sand.u32 %s118, 1
          %s564 = smul.addr %s563, 8
          %s565 = scalar_lea.vmem [#allocation9], %s564
          %566 = dma.done %s562, 128
        $region64: #{tpu_custom_call.1} parent=59 // pred_fallthru
          _
      $region60: #{tpu_custom_call.1} parent=5 // pred_fallthru
        _
    $region6: #{tpu_custom_call.1} parent=1 // loop_footer
      %s18 = sadd.s32 1, %s14
    $region7: #{tpu_custom_call.1} parent=1 // loop_footer_branch
      %13 = sbr.rel target = $region3
    $region8: #{tpu_custom_call.1} parent=1 // loop_exit
      _
    %567 = vsyncpa [#allocation4], 1
    %s568 = scalar_lea.sflag [#allocation4], 1
    %569 = vsyncpa %s568, 1
    %570 = vsyncpa [#allocation7], 1
    %571 = vsyncpa [#allocation5], 1
    %s572 = scalar_lea.sflag [#allocation5], 1
    %573 = vsyncpa %s572, 1

</llo_original>
